<compile_context>
chip_gen: v7x
topology: tpu7x:2x2x1
jax: 0.10.0
libtpu: 0.0.40
codegen_flags: <defaults>
</compile_context>

<pallas_src>
import functools

import jax
import jax.numpy as jnp
from jax import lax
from jax.experimental import pallas as pl
from jax.experimental.pallas import tpu as pltpu

BN_EPS = 1e-5
LANE = 128
NEG_BIG = -1e30          # effectively -inf for the padded softmax lanes
TILE_B = 128             # batch tile for the two-pass (large-batch) path
WHOLE_BATCH_MAX = 4096   # rows kept fully VMEM-resident on the single-step path


def _round_up(x, m):
    return (x + m - 1) // m * m


def _default_mxu_dtype():
    # bf16 operands (f32 accumulate) for the 256-deep bf16 MXUs on v6e/v7x;
    # keep f32 operands on v5e/older where the f32 penalty is small.
    try:
        kind = jax.devices()[0].device_kind.lower()
    except Exception:
        return jnp.float32
    if "v6" in kind or "v7" in kind or "7x" in kind:
        return jnp.bfloat16
    return jnp.float32


def _linear2_softmax(h, w2_ref, b2_ref, d_out):
    """h (f32, post-ReLU) -> Linear2 (128-lane padded) -> softmax -> d_out lanes."""
    logits = jnp.dot(h.astype(w2_ref.dtype), w2_ref[...],
                     preferred_element_type=jnp.float32) + b2_ref[...]
    # Padded lanes: w2 pad cols are 0 and h >= 0, so h @ w2_pad == 0 exactly;
    # b2 pad is NEG_BIG -> padded logits already "-inf", no in-kernel masking.
    m = jnp.max(logits, axis=1, keepdims=True)
    e = jnp.exp(logits - m)
    inv = pl.reciprocal(jnp.sum(e, axis=1, keepdims=True), approx=True)  # EUP
    return e[:, :d_out] * inv


def mlp_whole_batch_kernel(x_ref, w1_ref, b1_ref, g1_ref, beta1_ref,
                           w2_ref, b2_ref, o_ref, *, d_out):
    # Linear1 (MXU, f32 accumulate)
    h = jnp.dot(x_ref[...].astype(w1_ref.dtype), w1_ref[...],
                preferred_element_type=jnp.float32) + b1_ref[...]
    # Full-batch BatchNorm statistics (one pass, biased variance, eps=1e-5).
    # TODO(synk): E[h^2]-E[h]^2 can cancel badly if reused with large-mean
    # activations; switch to a two-pass/Welford formulation in that case.
    inv_n = 1.0 / h.shape[0]
    mean = jnp.sum(h, axis=0, keepdims=True) * inv_n
    var = jnp.sum(h * h, axis=0, keepdims=True) * inv_n - mean * mean
    scale = g1_ref[...] * lax.rsqrt(var + BN_EPS)   # gamma folded into scale
    shift = beta1_ref[...] - mean * scale           # folded BN shift
    h = jnp.maximum(h * scale + shift, 0.0)         # BN + ReLU
    o_ref[...] = _linear2_softmax(h, w2_ref, b2_ref, d_out).astype(o_ref.dtype)


def bn_stats_kernel(x_ref, w1_ref, b1_ref, sum_ref, ssq_ref):
    # Pass 1 of the tiled path: accumulate sum / sum-of-squares of h over the
    # batch grid axis (outputs stay resident -> axis must be "arbitrary").
    @pl.when(pl.program_id(0) == 0)
    def _():
        sum_ref[...] = jnp.zeros_like(sum_ref)
        ssq_ref[...] = jnp.zeros_like(ssq_ref)

    h = jnp.dot(x_ref[...].astype(w1_ref.dtype), w1_ref[...],
                preferred_element_type=jnp.float32) + b1_ref[...]
    sum_ref[...] += jnp.sum(h, axis=0, keepdims=True)
    ssq_ref[...] += jnp.sum(h * h, axis=0, keepdims=True)


def mlp_tile_kernel(x_ref, w1_ref, b1_ref, scale_ref, shift_ref,
                    w2_ref, b2_ref, o_ref, *, d_out):
    # Pass 2 of the tiled path: recompute the cheap K=32 matmul1 (cheaper than
    # round-tripping h through HBM), normalize+ReLU, matmul2, softmax, store.
    h = jnp.dot(x_ref[...].astype(w1_ref.dtype), w1_ref[...],
                preferred_element_type=jnp.float32) + b1_ref[...]
    h = jnp.maximum(h * scale_ref[...] + shift_ref[...], 0.0)
    o_ref[...] = _linear2_softmax(h, w2_ref, b2_ref, d_out).astype(o_ref.dtype)


def mlp_forward(x, w1, b1, g1, beta1, w2, b2, *, mxu_dtype=None):
    batch, d_in = x.shape
    d_hidden = w1.shape[1]
    d_out = w2.shape[1]
    if mxu_dtype is None:
        mxu_dtype = _default_mxu_dtype()

    # Lane-dense 128-wide second matmul: pad w2 cols with 0 and b2 with -1e30
    # so padded logits are already "-inf". The kernel output itself is stored
    # narrow (batch, d_out) -- no padded HBM writeback, no post-kernel slice.
    d_out_p = _round_up(d_out, LANE)
    w2_p = jnp.pad(w2, ((0, 0), (0, d_out_p - d_out))).astype(mxu_dtype)
    b2_p = jnp.pad(b2, ((0, 0), (0, d_out_p - d_out)), constant_values=NEG_BIG)
    w1_c = w1.astype(mxu_dtype)

    out_shape = jax.ShapeDtypeStruct((batch, d_out), jnp.float32)
    use_tiled = batch % TILE_B == 0 and batch >= 2 * TILE_B

    if not use_tiled:
        # Whole-batch single-grid-step path (BN stats need the full batch).
        # x passed unpadded; full-array VMEM specs are exempt from (8,128).
        # TODO(synk): batches > WHOLE_BATCH_MAX that are not a multiple of
        # TILE_B still take this path and would need the scoped VMEM limit
        # raised further (or row-masked partial tiles in the stats pass).
        kernel = functools.partial(mlp_whole_batch_kernel, d_out=d_out)
        return pl.pallas_call(
            kernel,
            out_shape=out_shape,
            in_specs=[pl.BlockSpec(memory_space=pltpu.MemorySpace.VMEM)] * 7,
            out_specs=pl.BlockSpec(memory_space=pltpu.MemorySpace.VMEM),
            compiler_params=pltpu.CompilerParams(vmem_limit_bytes=32 << 20),
        )(x, w1_c, b1, g1, beta1, w2_p, b2_p)

    # ---- Large-batch two-pass grid-tiled BN path ----
    grid = (batch // TILE_B,)
    full = lambda i: (0, 0)

    s, ss = pl.pallas_call(
        bn_stats_kernel,
        out_shape=(jax.ShapeDtypeStruct((1, d_hidden), jnp.float32),
                   jax.ShapeDtypeStruct((1, d_hidden), jnp.float32)),
        grid=grid,
        in_specs=[pl.BlockSpec((TILE_B, d_in), lambda i: (i, 0)),
                  pl.BlockSpec((d_in, d_hidden), full),
                  pl.BlockSpec((1, d_hidden), full)],
        out_specs=(pl.BlockSpec((1, d_hidden), full),
                   pl.BlockSpec((1, d_hidden), full)),
        compiler_params=pltpu.CompilerParams(
            dimension_semantics=("arbitrary",),
            vmem_limit_bytes=32 << 20),
    )(x, w1_c, b1)

    # Tiny (1, 64) stat finalization on the host side.
    inv_n = 1.0 / batch
    mean = s * inv_n
    var = ss * inv_n - mean * mean
    scale = g1 * lax.rsqrt(var + BN_EPS)
    shift = beta1 - mean * scale

    kernel = functools.partial(mlp_tile_kernel, d_out=d_out)
    return pl.pallas_call(
        kernel,
        out_shape=out_shape,
        grid=grid,
        in_specs=[pl.BlockSpec((TILE_B, d_in), lambda i: (i, 0)),
                  pl.BlockSpec((d_in, d_hidden), full),
                  pl.BlockSpec((1, d_hidden), full),
                  pl.BlockSpec((1, d_hidden), full),
                  pl.BlockSpec((1, d_hidden), full),
                  pl.BlockSpec((d_hidden, d_out_p), full),
                  pl.BlockSpec((1, d_out_p), full)],
        out_specs=pl.BlockSpec((TILE_B, d_out), lambda i: (i, 0)),
        compiler_params=pltpu.CompilerParams(
            dimension_semantics=("parallel",),   # megacore sharding on v7x
            vmem_limit_bytes=32 << 20),
    )(x, w1_c, b1, scale, shift, w2_p, b2_p)


def mlp_reference(x, w1, b1, g1, beta1, w2, b2):
    h = x @ w1 + b1
    mean = jnp.mean(h, axis=0, keepdims=True)
    var = jnp.mean((h - mean) ** 2, axis=0, keepdims=True)
    h = (h - mean) / jnp.sqrt(var + BN_EPS) * g1 + beta1
    h = jnp.maximum(h, 0.0)
    logits = h @ w2 + b2
    return jax.nn.softmax(logits, axis=1)


if __name__ == "__main__":
    # Config: layer_num=2, dims=(32, 64, 16)
    batch, d_in, d_hidden, d_out = 8, 32, 64, 16

    key = jax.random.PRNGKey(0)
    kx, kw1, kb1, kw2, kb2, kx2 = jax.random.split(key, 6)

    x = jax.random.normal(kx, (batch, d_in), dtype=jnp.float32)
    # Linear weights ~ N(0, 0.02) per MLP.init_weight(); stored as (in, out).
    w1 = 0.02 * jax.random.normal(kw1, (d_in, d_hidden), dtype=jnp.float32)
    b1 = 0.01 * jax.random.normal(kb1, (1, d_hidden), dtype=jnp.float32)
    # BatchNorm1d affine params (torch default init: weight=1, bias=0).
    g1 = jnp.ones((1, d_hidden), dtype=jnp.float32)
    beta1 = jnp.zeros((1, d_hidden), dtype=jnp.float32)
    w2 = 0.02 * jax.random.normal(kw2, (d_hidden, d_out), dtype=jnp.float32)
    b2 = 0.01 * jax.random.normal(kb2, (1, d_out), dtype=jnp.float32)

    # Small batch -> whole-batch single-grid-step path.
    out = jax.block_until_ready(mlp_forward(x, w1, b1, g1, beta1, w2, b2))
    expected = mlp_reference(x, w1, b1, g1, beta1, w2, b2)
    assert out.shape == (batch, d_out)
    # approx reciprocal + (possibly) bf16 MXU operands => relaxed tolerance
    assert bool(jnp.allclose(jnp.sum(out, axis=1), 1.0, atol=2e-3))
    assert bool(jnp.allclose(out, expected, atol=2e-3, rtol=2e-3))

    # Larger batch -> two-pass grid-tiled BN path (pipelined, parallel batch axis).
    big = 512
    x_big = jax.random.normal(kx2, (big, d_in), dtype=jnp.float32)
    out_big = jax.block_until_ready(
        mlp_forward(x_big, w1, b1, g1, beta1, w2, b2))
    exp_big = mlp_reference(x_big, w1, b1, g1, beta1, w2, b2)
    assert out_big.shape == (big, d_out)
    assert bool(jnp.allclose(out_big, exp_big, atol=2e-3, rtol=2e-3))

    print("KERNEL_OK")
</pallas_src>

<mosaic_0001>
module attributes {stable_mosaic.version = 11 : i64} {
  func.func @mlp_whole_batch_kernel(%arg0: memref<8x32xf32, #tpu.memory_space<vmem>>, %arg1: memref<32x64xf32, #tpu.memory_space<vmem>>, %arg2: memref<1x64xf32, #tpu.memory_space<vmem>>, %arg3: memref<1x64xf32, #tpu.memory_space<vmem>>, %arg4: memref<1x64xf32, #tpu.memory_space<vmem>>, %arg5: memref<64x128xf32, #tpu.memory_space<vmem>>, %arg6: memref<1x128xf32, #tpu.memory_space<vmem>>, %arg7: memref<8x16xf32, #tpu.memory_space<vmem>>) attributes {dimension_semantics = [], scalar_prefetch = 0 : i64, scratch_operands = 0 : i64, tpu.core_type = #tpu.core_type<tc>} {
    %c0 = arith.constant 0 : index
    %c0_0 = arith.constant 0 : index
    %0 = vector.load %arg0[%c0, %c0_0] : memref<8x32xf32, #tpu.memory_space<vmem>>, vector<8x32xf32>
    %c0_1 = arith.constant 0 : index
    %c0_2 = arith.constant 0 : index
    %1 = vector.load %arg1[%c0_1, %c0_2] : memref<32x64xf32, #tpu.memory_space<vmem>>, vector<32x64xf32>
    %cst = arith.constant dense<0.000000e+00> : vector<8x64xf32>
    %2 = tpu.matmul %0, %1, %cst {dimension_numbers = #tpu.dot_dimension_numbers<[1], [0], [0], [1], [0, 0, 1, 1], [], []>} : vector<8x32xf32>, vector<32x64xf32>, vector<8x64xf32> -> vector<8x64xf32>
    %c0_3 = arith.constant 0 : index
    %c0_4 = arith.constant 0 : index
    %3 = vector.load %arg2[%c0_3, %c0_4] : memref<1x64xf32, #tpu.memory_space<vmem>>, vector<1x64xf32>
    %4 = vector.broadcast %3 : vector<1x64xf32> to vector<8x64xf32>
    %5 = arith.addf %2, %4 : vector<8x64xf32>
    %cst_5 = arith.constant dense<0.000000e+00> : vector<64xf32>
    %6 = vector.multi_reduction <add>, %5, %cst_5 [0] : vector<8x64xf32> to vector<64xf32>
    %7 = vector.shape_cast %6 : vector<64xf32> to vector<1x64xf32>
    %cst_6 = arith.constant 1.250000e-01 : f32
    %8 = vector.broadcast %cst_6 : f32 to vector<1x64xf32>
    %9 = arith.mulf %7, %8 : vector<1x64xf32>
    %10 = arith.mulf %5, %5 : vector<8x64xf32>
    %cst_7 = arith.constant dense<0.000000e+00> : vector<64xf32>
    %11 = vector.multi_reduction <add>, %10, %cst_7 [0] : vector<8x64xf32> to vector<64xf32>
    %12 = vector.shape_cast %11 : vector<64xf32> to vector<1x64xf32>
    %cst_8 = arith.constant 1.250000e-01 : f32
    %13 = vector.broadcast %cst_8 : f32 to vector<1x64xf32>
    %14 = arith.mulf %12, %13 : vector<1x64xf32>
    %15 = arith.mulf %9, %9 : vector<1x64xf32>
    %16 = arith.subf %14, %15 : vector<1x64xf32>
    %c0_9 = arith.constant 0 : index
    %c0_10 = arith.constant 0 : index
    %17 = vector.load %arg3[%c0_9, %c0_10] : memref<1x64xf32, #tpu.memory_space<vmem>>, vector<1x64xf32>
    %cst_11 = arith.constant 9.99999974E-6 : f32
    %18 = vector.broadcast %cst_11 : f32 to vector<1x64xf32>
    %19 = arith.addf %16, %18 : vector<1x64xf32>
    %20 = math.rsqrt %19 : vector<1x64xf32>
    %21 = arith.mulf %17, %20 : vector<1x64xf32>
    %c0_12 = arith.constant 0 : index
    %c0_13 = arith.constant 0 : index
    %22 = vector.load %arg4[%c0_12, %c0_13] : memref<1x64xf32, #tpu.memory_space<vmem>>, vector<1x64xf32>
    %23 = arith.mulf %9, %21 : vector<1x64xf32>
    %24 = arith.subf %22, %23 : vector<1x64xf32>
    %25 = vector.broadcast %21 : vector<1x64xf32> to vector<8x64xf32>
    %26 = arith.mulf %5, %25 : vector<8x64xf32>
    %27 = vector.broadcast %24 : vector<1x64xf32> to vector<8x64xf32>
    %28 = arith.addf %26, %27 : vector<8x64xf32>
    %cst_14 = arith.constant 0.000000e+00 : f32
    %29 = vector.broadcast %cst_14 : f32 to vector<8x64xf32>
    %30 = arith.maximumf %28, %29 : vector<8x64xf32>
    %c0_15 = arith.constant 0 : index
    %c0_16 = arith.constant 0 : index
    %31 = vector.load %arg5[%c0_15, %c0_16] : memref<64x128xf32, #tpu.memory_space<vmem>>, vector<64x128xf32>
    %cst_17 = arith.constant dense<0.000000e+00> : vector<8x128xf32>
    %32 = tpu.matmul %30, %31, %cst_17 {dimension_numbers = #tpu.dot_dimension_numbers<[1], [0], [0], [1], [0, 0, 1, 1], [], []>} : vector<8x64xf32>, vector<64x128xf32>, vector<8x128xf32> -> vector<8x128xf32>
    %c0_18 = arith.constant 0 : index
    %c0_19 = arith.constant 0 : index
    %33 = vector.load %arg6[%c0_18, %c0_19] : memref<1x128xf32, #tpu.memory_space<vmem>>, vector<1x128xf32>
    %34 = vector.broadcast %33 : vector<1x128xf32> to vector<8x128xf32>
    %35 = arith.addf %32, %34 : vector<8x128xf32>
    %cst_20 = arith.constant dense<0xFF800000> : vector<8xf32>
    %36 = vector.multi_reduction <maximumf>, %35, %cst_20 [1] : vector<8x128xf32> to vector<8xf32>
    %37 = vector.shape_cast %36 : vector<8xf32> to vector<8x1xf32>
    %38 = vector.broadcast %37 : vector<8x1xf32> to vector<8x128xf32>
    %39 = arith.subf %35, %38 : vector<8x128xf32>
    %40 = math.exp %39 : vector<8x128xf32>
    %cst_21 = arith.constant dense<0.000000e+00> : vector<8xf32>
    %41 = vector.multi_reduction <add>, %40, %cst_21 [1] : vector<8x128xf32> to vector<8xf32>
    %42 = vector.shape_cast %41 : vector<8xf32> to vector<8x1xf32>
    %43 = tpu.reciprocal %42 {approx = true} : vector<8x1xf32> -> vector<8x1xf32>
    %44 = vector.extract_strided_slice %40 {offsets = [0, 0], sizes = [8, 16], strides = [1, 1]} : vector<8x128xf32> to vector<8x16xf32>
    %45 = vector.broadcast %43 : vector<8x1xf32> to vector<8x16xf32>
    %46 = arith.mulf %44, %45 : vector<8x16xf32>
    %c0_22 = arith.constant 0 : index
    %c0_23 = arith.constant 0 : index
    %47 = vector.load %arg7[%c0_22, %c0_23] : memref<8x16xf32, #tpu.memory_space<vmem>>, vector<8x16xf32>
    tpu.vector_store %arg7[%c0_22, %c0_23], %46 {strides = array<i32>} : memref<8x16xf32, #tpu.memory_space<vmem>>, vector<8x16xf32>,
    return
  }
}

</mosaic_0001>

<llo_original>
// kernel: tpu_custom_call.1
$region0: #{tpu_custom_call.1}
  #allocation0 [shape = 'u32[]', space=smem, size = 0x4, offset = 0x4, fixed_abs, tag = 'smem constant byte address 0x4 - core index']
  #allocation1 [shape = 'u32[144,128]{1,0:T(1,128)}', space=vmem, size = 0x12000, scoped, tag = 'internal scratch']
  %s0 = inlined_call_operand.hbm [shape: f32[8,32], index: 0, kind: input, shape index: {}]
  %s1 = inlined_call_operand.hbm [shape: f32[32,64], index: 1, kind: input, shape index: {}]
  %s2 = inlined_call_operand.vmem [shape: f32[1,64], index: 2, kind: input, shape index: {}]
  %s3 = inlined_call_operand.vmem [shape: f32[1,64], index: 3, kind: input, shape index: {}]
  %s4 = inlined_call_operand.vmem [shape: f32[1,64], index: 4, kind: input, shape index: {}]
  %s5 = inlined_call_operand.hbm [shape: f32[64,128], index: 5, kind: input, shape index: {}]
  %s6 = inlined_call_operand.vmem [shape: f32[1,128], index: 6, kind: input, shape index: {}]
  %s7 = inlined_call_operand.hbm [shape: f32[8,16], index: 7, kind: output, shape index: {}]
  %s8 = sld [smem:[#allocation0]]
  $region50: #{tpu_custom_call.1} parent=0
    _
  %s10 = ssub.s32 1, %s8
  %s11 = scalar_select 0, %s10, %s8
  $region1: #{tpu_custom_call.1} parent=0
    #allocation2 [shape = 'u8[4096]{0}', space=vmem, size = 0x1000, scoped, tag = 'input window, operand 0, single buffered']
    #allocation3 [shape = 's32[1]{0}', space=sflag, size = 0x4, scoped, tag = 'scoped memory for tpu_custom_call.1']
    #allocation4 [shape = 's32[1]{0}', space=sflag, size = 0x4, scoped, tag = 'scoped memory for tpu_custom_call.1']
    #allocation5 [shape = 'u8[16384]{0}', space=vmem, size = 0x4000, scoped, tag = 'input window, operand 1, single buffered']
    #allocation6 [shape = 's32[1]{0}', space=sflag, size = 0x4, scoped, tag = 'scoped memory for tpu_custom_call.1']
    #allocation7 [shape = 'u8[32768]{0}', space=vmem, size = 0x8000, scoped, tag = 'input window, operand 5, single buffered']
    #allocation8 [shape = 'u8[4096]{0}', space=vmem, size = 0x1000, scoped, tag = 'output window, operand 0, single buffered']
    %12 = vsyncpa [#allocation3], 0
    %13 = vsyncpa [#allocation6], 0
    %14 = vsyncpa [#allocation4], 0
    // Predicated region
    $region2: #{tpu_custom_call.1} parent=1 // pred_check
      _
    $region3: #{tpu_custom_call.1} parent=1 // pred_check_branch
      %16 = sbr.rel (0) target = $region5
    $region4: #{tpu_custom_call.1} parent=1 // pred_region
      %s18 = ssub.s32 128, 128
      %19 = vsyncadd [#allocation3], %s18
      %s21 = sshll.u32 [#allocation2], 4
      %s22 = int_to_ptr.vmem [resolvable:$true] %s21
      %24 = dma.hbm_to_vmem [thread:$0]  %s0, 128, %s22, [#allocation3]
    $region5: #{tpu_custom_call.1} parent=1 // pred_fallthru
      _
    // Predicated region
    $region6: #{tpu_custom_call.1} parent=1 // pred_check
      _
    $region7: #{tpu_custom_call.1} parent=1 // pred_check_branch
      %26 = sbr.rel (0) target = $region9
    $region8: #{tpu_custom_call.1} parent=1 // pred_region
      %s28 = ssub.s32 512, 512
      %29 = vsyncadd [#allocation6], %s28
      %s30 = sshll.u32 [#allocation5], 4
      %s31 = int_to_ptr.vmem [resolvable:$true] %s30
      %36 = dma.hbm_to_vmem [thread:$0]  %s1, 512, %s31, [#allocation6], 128, 128, 8
    $region9: #{tpu_custom_call.1} parent=1 // pred_fallthru
      _
    // Predicated region
    $region10: #{tpu_custom_call.1} parent=1 // pred_check
      _
    $region11: #{tpu_custom_call.1} parent=1 // pred_check_branch
      %38 = sbr.rel (0) target = $region13
    $region12: #{tpu_custom_call.1} parent=1 // pred_region
      _
    $region13: #{tpu_custom_call.1} parent=1 // pred_fallthru
      _
    // Predicated region
    $region14: #{tpu_custom_call.1} parent=1 // pred_check
      _
    $region15: #{tpu_custom_call.1} parent=1 // pred_check_branch
      %40 = sbr.rel (0) target = $region17
    $region16: #{tpu_custom_call.1} parent=1 // pred_region
      _
    $region17: #{tpu_custom_call.1} parent=1 // pred_fallthru
      _
    // Predicated region
    $region18: #{tpu_custom_call.1} parent=1 // pred_check
      _
    $region19: #{tpu_custom_call.1} parent=1 // pred_check_branch
      %42 = sbr.rel (0) target = $region21
    $region20: #{tpu_custom_call.1} parent=1 // pred_region
      _
    $region21: #{tpu_custom_call.1} parent=1 // pred_fallthru
      _
    // Predicated region
    $region22: #{tpu_custom_call.1} parent=1 // pred_check
      _
    $region23: #{tpu_custom_call.1} parent=1 // pred_check_branch
      %44 = sbr.rel (0) target = $region25
    $region24: #{tpu_custom_call.1} parent=1 // pred_region
      %s46 = ssub.s32 1024, 1024
      %47 = vsyncadd [#allocation6], %s46
      %s48 = sshll.u32 [#allocation7], 4
      %s49 = int_to_ptr.vmem [resolvable:$true] %s48
      %54 = dma.hbm_to_vmem [thread:$0]  %s5, 1024, %s49, [#allocation6], 128, 128, 8
    $region25: #{tpu_custom_call.1} parent=1 // pred_fallthru
      _
    // Predicated region
    $region26: #{tpu_custom_call.1} parent=1 // pred_check
      _
    $region27: #{tpu_custom_call.1} parent=1 // pred_check_branch
      %56 = sbr.rel (0) target = $region29
    $region28: #{tpu_custom_call.1} parent=1 // pred_region
      _
    $region29: #{tpu_custom_call.1} parent=1 // pred_fallthru
      _
    // Predicated region
    $region30: #{tpu_custom_call.1} parent=1 // pred_check
      _
    $region31: #{tpu_custom_call.1} parent=1 // pred_check_branch
      %58 = sbr.rel (0) target = $region33
    $region32: #{tpu_custom_call.1} parent=1 // pred_region
      %59 = dma.done [#allocation3], 128
    $region33: #{tpu_custom_call.1} parent=1 // pred_fallthru
      _
    // Predicated region
    $region34: #{tpu_custom_call.1} parent=1 // pred_check
      _
    $region35: #{tpu_custom_call.1} parent=1 // pred_check_branch
      %61 = sbr.rel (0) target = $region37
    $region36: #{tpu_custom_call.1} parent=1 // pred_region
      %62 = dma.done [#allocation6], 512
    $region37: #{tpu_custom_call.1} parent=1 // pred_fallthru
      _
    // Predicated region
    $region38: #{tpu_custom_call.1} parent=1 // pred_check
      _
    $region39: #{tpu_custom_call.1} parent=1 // pred_check_branch
      %64 = sbr.rel (0) target = $region41
    $region40: #{tpu_custom_call.1} parent=1 // pred_region
      %65 = dma.done [#allocation6], 1024
    $region41: #{tpu_custom_call.1} parent=1 // pred_fallthru
      _
    %v66 = vld [vmem:[#allocation2] sm:$0xff]
    %v67 = vld [vmem:[#allocation5] sm:$0xff]
    %v68 = vld [vmem:[#allocation5 + $0x8] sm:$0xff]
    %v69 = vld [vmem:[#allocation5 + $0x10] sm:$0xff]
    %v70 = vld [vmem:[#allocation5 + $0x18] sm:$0xff]
    %v71 = vld [vmem:[%s2] sm:$0x1]
    %v73 = vlaneseq
    %v74 = vshrl.u32 %v73, 7
    %v75 = vsub.s32 0, %v74
    %v76 = vrot.slane %v71, %v75
    %vm78 = vcmask 261120
    %v80 = vsel %vm78, %v66, 0
    %82 = vmatprep.subr.mxu0 0.0
    %83 = vmatpush1.msra.mxu0 %v67
    %84 = vmatprep.subr.mxu0 0.0
    %85 = vmatpush1.msra.mxu0 %v68
    %86 = vmatprep.subr.mxu0 0.0
    %87 = vmatpush1.msra.mxu0 %v69
    %88 = vmatprep.subr.mxu0 0.0
    %89 = vmatpush1.msra.mxu0 %v70
    %90 = vmatprep.subr.mxu0 0.0
    %91 = vmatpush1.msra.mxu0 0.0
    %92 = vmatprep.subr.mxu0 0.0
    %93 = vmatpush1.msra.mxu0 0.0
    %94 = vmatprep.subr.mxu0 0.0
    %95 = vmatpush1.msra.mxu0 0.0
    %96 = vmatprep.subr.mxu0 0.0
    %97 = vmatpush1.msra.mxu0 0.0
    %98 = vmatprep.subr.mxu0 0.0
    %99 = vmatpush1.msra.mxu0 0.0
    %100 = vmatprep.subr.mxu0 0.0
    %101 = vmatpush1.msra.mxu0 0.0
    %102 = vmatprep.subr.mxu0 0.0
    %103 = vmatpush1.msra.mxu0 0.0
    %104 = vmatprep.subr.mxu0 0.0
    %105 = vmatpush1.msra.mxu0 0.0
    %106 = vmatprep.subr.mxu0 0.0
    %107 = vmatpush1.msra.mxu0 0.0
    %108 = vmatprep.subr.mxu0 0.0
    %109 = vmatpush1.msra.mxu0 0.0
    %110 = vmatprep.subr.mxu0 0.0
    %111 = vmatpush1.msra.mxu0 0.0
    %112 = vmatprep.subr.mxu0 0.0
    %113 = vmatpush1.msra.mxu0 0.0
    %114 = vmatprep.subr.mxu0 0.0
    %115 = vmatpush1.msra.mxu0 0.0
    %116 = vmatprep.subr.mxu0 0.0
    %117 = vmatpush1.msra.mxu0 0.0
    %118 = vmatprep.subr.mxu0 0.0
    %119 = vmatpush1.msra.mxu0 0.0
    %120 = vmatprep.subr.mxu0 0.0
    %121 = vmatpush1.msra.mxu0 0.0
    %122 = vmatprep.subr.mxu0 0.0
    %123 = vmatpush1.msra.mxu0 0.0
    %124 = vmatprep.subr.mxu0 0.0
    %125 = vmatpush1.msra.mxu0 0.0
    %126 = vmatprep.subr.mxu0 0.0
    %127 = vmatpush1.msra.mxu0 0.0
    %128 = vmatprep.subr.mxu0 0.0
    %129 = vmatpush1.msra.mxu0 0.0
    %130 = vmatprep.subr.mxu0 0.0
    %131 = vmatpush1.msra.mxu0 0.0
    %132 = vmatprep.subr.mxu0 0.0
    %133 = vmatpush1.msra.mxu0 0.0
    %134 = vmatprep.subr.mxu0 0.0
    %135 = vmatpush1.msra.mxu0 0.0
    %136 = vmatprep.subr.mxu0 0.0
    %137 = vmatpush1.msra.mxu0 0.0
    %138 = vmatprep.subr.mxu0 0.0
    %139 = vmatpush1.msra.mxu0 0.0
    %140 = vmatprep.subr.mxu0 0.0
    %141 = vmatpush1.msra.mxu0 0.0
    %142 = vmatprep.subr.mxu0 0.0
    %143 = vmatpush1.msra.mxu0 0.0
    %144 = vmatprep.subr.mxu0 0.0
    %145 = vmatpush1.msra.mxu0 0.0
    %146 = vmatprep.mubr.f32.mxu0 0.0
    %147 = vmatmul.mubr.f32.gmra.mrb[0].mxu0 %v80
    %v148 = vpop.f32.mrb[0].mxu0
    %v149 = vadd.f32 %v76, %v148
    %v150 = vpop.f32.mrb[0].mxu0
    %151 = vdwg.mxu0
    %vm152 = vcmask 523264
    %v153 = vsel %vm152, %v149, 0.0
    %v154 = vrot.slane %v153, 4
    %v155 = vadd.f32 %v153, %v154
    %v156 = vrot.slane %v155, 2
    %v157 = vadd.f32 %v155, %v156
    %v158 = vrot.slane %v157, 1
    %v159 = vadd.f32 %v157, %v158
    %v160 = vmul.f32 %v159, 0.125
    %v161 = vmul.f32 %v149, %v149
    %v162 = vsel %vm152, %v161, 0.0
    %v163 = vrot.slane %v162, 4
    %v164 = vadd.f32 %v162, %v163
    %v165 = vrot.slane %v164, 2
    %v166 = vadd.f32 %v164, %v165
    %v167 = vrot.slane %v166, 1
    %v168 = vadd.f32 %v166, %v167
    %v169 = vmul.f32 %v168, 0.125
    %v170 = vmul.f32 %v160, %v160
    %v171 = vsub.f32 %v169, %v170
    %v172 = vld [vmem:[%s3] sm:$0x1]
    %v173 = vadd.f32 %v171, 1e-05
    %v174 = vrsqrt.pop %v173
    %v175 = vmul.f32 %v172, %v174
    %v176 = vld [vmem:[%s4] sm:$0x1]
    %v177 = vmul.f32 %v160, %v175
    %v178 = vsub.f32 %v176, %v177
    %v180 = vlaneseq
    %v181 = vshrl.u32 %v180, 7
    %v182 = vsub.s32 0, %v181
    %v183 = vrot.slane %v175, %v182
    %v185 = vmul.f32 %v149, %v183
    %v187 = vlaneseq
    %v188 = vshrl.u32 %v187, 7
    %v189 = vsub.s32 0, %v188
    %v190 = vrot.slane %v178, %v189
    %v192 = vadd.f32 %v185, %v190
    %v193 = vmax.f32 %v192, 0.0
    %v194 = vld [vmem:[#allocation7] sm:$0xff]
    %v195 = vld [vmem:[#allocation7 + $0x8] sm:$0xff]
    %v196 = vld [vmem:[#allocation7 + $0x10] sm:$0xff]
    %v197 = vld [vmem:[#allocation7 + $0x18] sm:$0xff]
    %v198 = vld [vmem:[#allocation7 + $0x20] sm:$0xff]
    %v199 = vld [vmem:[#allocation7 + $0x28] sm:$0xff]
    %v200 = vld [vmem:[#allocation7 + $0x30] sm:$0xff]
    %v201 = vld [vmem:[#allocation7 + $0x38] sm:$0xff]
    %v202 = vld [vmem:[%s6] sm:$0x1]
    %v204 = vlaneseq
    %v205 = vshrl.u32 %v204, 7
    %v206 = vsub.s32 0, %v205
    %v207 = vrot.slane %v202, %v206
    %v210 = vsel %vm152, %v193, 0
    %212 = vmatprep.subr.mxu0 0.0
    %213 = vmatpush1.msra.mxu0 %v194
    %214 = vmatprep.subr.mxu0 0.0
    %215 = vmatpush1.msra.mxu0 %v195
    %216 = vmatprep.subr.mxu0 0.0
    %217 = vmatpush1.msra.mxu0 %v196
    %218 = vmatprep.subr.mxu0 0.0
    %219 = vmatpush1.msra.mxu0 %v197
    %220 = vmatprep.subr.mxu0 0.0
    %221 = vmatpush1.msra.mxu0 %v198
    %222 = vmatprep.subr.mxu0 0.0
    %223 = vmatpush1.msra.mxu0 %v199
    %224 = vmatprep.subr.mxu0 0.0
    %225 = vmatpush1.msra.mxu0 %v200
    %226 = vmatprep.subr.mxu0 0.0
    %227 = vmatpush1.msra.mxu0 %v201
    %228 = vmatprep.subr.mxu0 0.0
    %229 = vmatpush1.msra.mxu0 0.0
    %230 = vmatprep.subr.mxu0 0.0
    %231 = vmatpush1.msra.mxu0 0.0
    %232 = vmatprep.subr.mxu0 0.0
    %233 = vmatpush1.msra.mxu0 0.0
    %234 = vmatprep.subr.mxu0 0.0
    %235 = vmatpush1.msra.mxu0 0.0
    %236 = vmatprep.subr.mxu0 0.0
    %237 = vmatpush1.msra.mxu0 0.0
    %238 = vmatprep.subr.mxu0 0.0
    %239 = vmatpush1.msra.mxu0 0.0
    %240 = vmatprep.subr.mxu0 0.0
    %241 = vmatpush1.msra.mxu0 0.0
    %242 = vmatprep.subr.mxu0 0.0
    %243 = vmatpush1.msra.mxu0 0.0
    %244 = vmatprep.subr.mxu0 0.0
    %245 = vmatpush1.msra.mxu0 0.0
    %246 = vmatprep.subr.mxu0 0.0
    %247 = vmatpush1.msra.mxu0 0.0
    %248 = vmatprep.subr.mxu0 0.0
    %249 = vmatpush1.msra.mxu0 0.0
    %250 = vmatprep.subr.mxu0 0.0
    %251 = vmatpush1.msra.mxu0 0.0
    %252 = vmatprep.subr.mxu0 0.0
    %253 = vmatpush1.msra.mxu0 0.0
    %254 = vmatprep.subr.mxu0 0.0
    %255 = vmatpush1.msra.mxu0 0.0
    %256 = vmatprep.subr.mxu0 0.0
    %257 = vmatpush1.msra.mxu0 0.0
    %258 = vmatprep.subr.mxu0 0.0
    %259 = vmatpush1.msra.mxu0 0.0
    %260 = vmatprep.subr.mxu0 0.0
    %261 = vmatpush1.msra.mxu0 0.0
    %262 = vmatprep.subr.mxu0 0.0
    %263 = vmatpush1.msra.mxu0 0.0
    %264 = vmatprep.subr.mxu0 0.0
    %265 = vmatpush1.msra.mxu0 0.0
    %266 = vmatprep.subr.mxu0 0.0
    %267 = vmatpush1.msra.mxu0 0.0
    %268 = vmatprep.subr.mxu0 0.0
    %269 = vmatpush1.msra.mxu0 0.0
    %270 = vmatprep.subr.mxu0 0.0
    %271 = vmatpush1.msra.mxu0 0.0
    %272 = vmatprep.subr.mxu0 0.0
    %273 = vmatpush1.msra.mxu0 0.0
    %274 = vmatprep.subr.mxu0 0.0
    %275 = vmatpush1.msra.mxu0 0.0
    %276 = vmatprep.mubr.f32.mxu0 0.0
    %277 = vmatmul.mubr.f32.gmra.mrb[0].mxu0 %v210
    %v278 = vpop.f32.mrb[0].mxu0
    %v279 = vadd.f32 %v207, %v278
    %v280 = vpop.f32.mrb[0].mxu0
    %281 = vdwg.mxu0
    %282 = vmax.xlane.f32.xlu0 %v279
    %v283 = vpop.xlane.xlu0 %282
    %v284 = vsub.f32 %v279, %v283
    %v285 = vmul.f32 %v284, 1.442695
    %v286 = vpow.pop %v285
    %287 = vadd.xlane.f32.xlu0 %v286
    %v288 = vpop.xlane.xlu0 %287
    %v289 = vrcp.pop %v288
    %v290 = vmul.f32 %v286, %v289
    %vm291 = vcmask 130048
    %292 = vst.msk [vmem:[#allocation8] sm:$0xff] %vm291, %v290
    // Predicated region
    $region42: #{tpu_custom_call.1} parent=1 // pred_check
      _
    $region43: #{tpu_custom_call.1} parent=1 // pred_check_branch
      %294 = sbr.rel (0) target = $region45
    $region44: #{tpu_custom_call.1} parent=1 // pred_region
      %s296 = ssub.s32 128, 128
      %297 = vsyncadd [#allocation4], %s296
      %s299 = sshll.u32 [#allocation8], 4
      %s300 = int_to_ptr.vmem [resolvable:$true] %s299
      %302 = dma.vmem_to_hbm [thread:$0]  %s300, 128, %s7, [#allocation4]
    $region45: #{tpu_custom_call.1} parent=1 // pred_fallthru
      _
    // Predicated region
    $region46: #{tpu_custom_call.1} parent=1 // pred_check
      _
    $region47: #{tpu_custom_call.1} parent=1 // pred_check_branch
      %304 = sbr.rel (0) target = $region49
    $region48: #{tpu_custom_call.1} parent=1 // pred_region
      %305 = dma.done [#allocation4], 128
    $region49: #{tpu_custom_call.1} parent=1 // pred_fallthru
      _
    %306 = vsyncpa [#allocation3], 1
    %307 = vsyncpa [#allocation6], 1
    %308 = vsyncpa [#allocation4], 1

</llo_original>
